<compile_context>
chip_gen: v5e
topology: v5e:2x2
jax: 0.10.0
libtpu: 0.0.40
codegen_flags: <defaults>
</compile_context>

<pallas_src>
import jax
import jax.numpy as jnp
from jax import lax
from jax.experimental import pallas as pl
from jax.experimental.pallas import tpu as pltpu

_THIRD = 1.0 / 3.0


def _round_up(x, m):
    return ((int(x) + m - 1) // m) * m


def _tile_bytes(rows, cols, itemsize):
    return (_round_up(max(int(rows), 1), 8)
            * _round_up(max(int(cols), 1), 128) * itemsize)


# ----------------------------------------------------------------------------
# Kernels
# ----------------------------------------------------------------------------

def _resident_mxu_kernel(uidx_ref, iidx_ref,              # (TB, 1) int32 VMEM
                         ue_tab, up_tab, ie_tab, ip_tab,  # full tables (VMEM)
                         o_ref):                          # (TB, 2*D) packed
    tb = o_ref.shape[0]
    tdt = ue_tab.dtype
    u_idx = uidx_ref[...]                                 # (TB, 1)
    i_idx = iidx_ref[...]
    # One-hot gather on the MXU: onehot (TB, R) @ table (R, D).
    oh_u = (lax.broadcasted_iota(jnp.int32, (tb, ue_tab.shape[0]), 1)
            == u_idx).astype(tdt)
    oh_i = (lax.broadcasted_iota(jnp.int32, (tb, ie_tab.shape[0]), 1)
            == i_idx).astype(tdt)
    ue = jnp.dot(oh_u, ue_tab[...], preferred_element_type=jnp.float32)
    up = jnp.dot(oh_u, up_tab[...], preferred_element_type=jnp.float32)
    ie = jnp.dot(oh_i, ie_tab[...], preferred_element_type=jnp.float32)
    ip = jnp.dot(oh_i, ip_tab[...], preferred_element_type=jnp.float32)
    uf = ue + up + ue * up
    itf = ie + ip + ie * ip
    o_ref[...] = (jnp.concatenate([uf, itf], axis=-1) * _THIRD).astype(o_ref.dtype)


def _resident_rows_kernel(uidx_ref, iidx_ref,             # SMEM scalar prefetch
                          ue_tab, up_tab, ie_tab, ip_tab,  # full tables (VMEM)
                          o_ref):                          # (TB, 2*D) packed
    tb = o_ref.shape[0]
    base = pl.program_id(0) * tb
    # Per-row fused load + combine + store: no (TB, D) concatenate
    # intermediates (this kernel is load/store-slot bound, not VALU bound).
    for r in range(tb):
        u = uidx_ref[base + r]
        it = iidx_ref[base + r]
        ue = ue_tab[pl.ds(u, 1), :]
        up = up_tab[pl.ds(u, 1), :]
        ie = ie_tab[pl.ds(it, 1), :]
        ip = ip_tab[pl.ds(it, 1), :]
        row = jnp.concatenate([ue + up + ue * up, ie + ip + ie * ip], axis=-1)
        o_ref[pl.ds(r, 1), :] = (row * _THIRD).astype(o_ref.dtype)


def _hbm_gather_kernel(uidx_ref, iidx_ref,                 # SMEM scalar prefetch
                       ue_hbm, up_hbm, ie_hbm, ip_hbm,     # tables in HBM (ANY)
                       o_ref,                              # (TB, 2*D) packed
                       ue_buf, up_buf, ie_buf, ip_buf,     # (2, TB, D) each
                       sems):                              # DMA sems (2, 4)
    tb = o_ref.shape[0]
    step = pl.program_id(0)
    nsteps = pl.num_programs(0)
    srcs = (ue_hbm, up_hbm, ie_hbm, ip_hbm)
    bufs = (ue_buf, up_buf, ie_buf, ip_buf)

    def issue(block, slot):
        base = block * tb
        for r in range(tb):
            u = uidx_ref[base + r]
            it = iidx_ref[base + r]
            rows = (u, u, it, it)
            for t in range(4):
                pltpu.make_async_copy(
                    srcs[t].at[pl.ds(rows[t], 1), :],
                    bufs[t].at[slot, pl.ds(r, 1), :],
                    sems.at[slot, t],
                ).start()

    # Prime slot 0 on the very first step, then always prefetch the next
    # block's rows before waiting on the current slot (cross-step pipeline).
    @pl.when(step == 0)
    def _():
        issue(0, 0)

    @pl.when(step + 1 < nsteps)
    def _():
        issue(step + 1, (step + 1) & 1)

    slot = step & 1
    # Aggregate wait: all TB row copies for table t signal sems[slot, t]; a
    # single descriptor covering the whole (TB, D) buffer waits for the same
    # total byte count (DMA semaphores count bytes) -> 4 waits/step, not 4*TB.
    for t in range(4):
        pltpu.make_async_copy(bufs[t].at[slot], bufs[t].at[slot],
                              sems.at[slot, t]).wait()

    ue = ue_buf[slot]
    up = up_buf[slot]
    ie = ie_buf[slot]
    ip = ip_buf[slot]
    row = jnp.concatenate([ue + up + ue * up, ie + ip + ie * ip], axis=-1)
    o_ref[...] = (row * _THIRD).astype(o_ref.dtype)


# ----------------------------------------------------------------------------
# pallas_call builders
# ----------------------------------------------------------------------------

def _call_resident_mxu(uidx_col, iidx_col, tables, TB, B_pad, dtype,
                       single_buffer, vmem_limit):
    num_users, D = tables[0].shape
    num_items = tables[2].shape[0]
    grid = (B_pad // TB,)
    tab_kw = {"pipeline_mode": pl.Buffered(1)} if single_buffer else {}
    idx_spec = pl.BlockSpec((TB, 1), lambda c: (c, 0))

    def tab_spec(rows):
        return pl.BlockSpec((rows, D), lambda c: (0, 0), **tab_kw)

    grid_spec = pltpu.PrefetchScalarGridSpec(
        num_scalar_prefetch=0,
        grid=grid,
        in_specs=[idx_spec, idx_spec,
                  tab_spec(num_users), tab_spec(num_users),
                  tab_spec(num_items), tab_spec(num_items)],
        out_specs=pl.BlockSpec((TB, 2 * D), lambda c: (c, 0)))
    fn = pl.pallas_call(
        _resident_mxu_kernel,
        out_shape=jax.ShapeDtypeStruct((B_pad, 2 * D), dtype),
        grid_spec=grid_spec,
        compiler_params=pltpu.CompilerParams(
            dimension_semantics=("parallel",),
            vmem_limit_bytes=vmem_limit))
    return fn(uidx_col, iidx_col, *tables)


def _call_resident_rows(uidx, iidx, tables, TB, B_pad, dtype,
                        single_buffer, vmem_limit):
    num_users, D = tables[0].shape
    num_items = tables[2].shape[0]
    grid = (B_pad // TB,)
    tab_kw = {"pipeline_mode": pl.Buffered(1)} if single_buffer else {}

    def tab_spec(rows):
        return pl.BlockSpec((rows, D), lambda c, u, i: (0, 0), **tab_kw)

    grid_spec = pltpu.PrefetchScalarGridSpec(
        num_scalar_prefetch=2,
        grid=grid,
        in_specs=[tab_spec(num_users), tab_spec(num_users),
                  tab_spec(num_items), tab_spec(num_items)],
        out_specs=pl.BlockSpec((TB, 2 * D), lambda c, u, i: (c, 0)))
    fn = pl.pallas_call(
        _resident_rows_kernel,
        out_shape=jax.ShapeDtypeStruct((B_pad, 2 * D), dtype),
        grid_spec=grid_spec,
        compiler_params=pltpu.CompilerParams(
            dimension_semantics=("parallel",),
            vmem_limit_bytes=vmem_limit))
    return fn(uidx, iidx, *tables)


def _call_hbm(uidx, iidx, tables, TB, B_pad, dtype, vmem_limit):
    D = tables[0].shape[1]
    grid = (B_pad // TB,)
    grid_spec = pltpu.PrefetchScalarGridSpec(
        num_scalar_prefetch=2,
        grid=grid,
        in_specs=[pl.BlockSpec(memory_space=pl.ANY) for _ in range(4)],
        out_specs=pl.BlockSpec((TB, 2 * D), lambda c, u, i: (c, 0)),
        scratch_shapes=[pltpu.VMEM((2, TB, D), dtype) for _ in range(4)]
                       + [pltpu.SemaphoreType.DMA((2, 4))])
    fn = pl.pallas_call(
        _hbm_gather_kernel,
        out_shape=jax.ShapeDtypeStruct((B_pad, 2 * D), dtype),
        grid_spec=grid_spec,
        compiler_params=pltpu.CompilerParams(
            # The cross-step prefetch chain (step i fetches block i+1) needs
            # strictly in-order grid traversal on a single core.
            dimension_semantics=("arbitrary",),
            vmem_limit_bytes=vmem_limit))
    return fn(uidx, iidx, *tables)


# ----------------------------------------------------------------------------
# Wrapper
# ----------------------------------------------------------------------------

def embedding_model_forward(user_indices, item_indices,
                            user_embeddings, item_embeddings,
                            user_profiles, item_profiles,
                            *, block_rows=None, force_path=None,
                            onehot_max_rows=2048):
    """Pallas implementation of EmbeddingModel.forward.

    user_indices, item_indices : int (B,)
    *_embeddings, *_profiles   : float (num_rows, D)
    returns (user_features, item_features), each (B, D)
    force_path: None (auto), "resident", or "hbm".
    """
    num_users, D = user_embeddings.shape
    num_items, D_i = item_embeddings.shape
    assert D == D_i
    assert user_profiles.shape == (num_users, D)
    assert item_profiles.shape == (num_items, D)
    dtype = user_embeddings.dtype
    itemsize = jnp.dtype(dtype).itemsize
    B = int(user_indices.shape[0])

    # Clamp wrapper-side: Pallas VMEM reads / DMA source rows have no runtime
    # OOB check.
    uidx = jnp.clip(user_indices.astype(jnp.int32), 0, num_users - 1)
    iidx = jnp.clip(item_indices.astype(jnp.int32), 0, num_items - 1)

    # ---- VMEM budget (generation aware: 64 MiB on v7x, 128 on v5e/v6e) -----
    try:
        vmem_cap = int(pltpu.get_tpu_info().vmem_capacity_bytes)
    except Exception:
        vmem_cap = 64 * 1024 * 1024        # conservative: v7x physical VMEM
    budget = vmem_cap * 3 // 4             # ~48 MiB (v7x) / ~96 MiB (v5e/v6e)

    # ---- row-block size: >=8 sublanes, big enough to amortize the ~0.35us
    # per-step overhead, small enough to keep >=2 grid steps (v7x: 2 TCs).
    tb_cap = max(8, _round_up(-(-B // 2), 8))

    def pick_tb(default):
        if block_rows is not None:
            return max(8, _round_up(int(block_rows), 8))
        return max(8, min(_round_up(default, 8), tb_cap))

    use_mxu = max(num_users, num_items) <= int(onehot_max_rows)
    TB_res = pick_tb(128 if use_mxu else 64)

    # ---- path dispatch ------------------------------------------------------
    tab_bytes_1x = 2 * (_tile_bytes(num_users, D, itemsize)
                        + _tile_bytes(num_items, D, itemsize))
    io_bytes_res = (2 * _tile_bytes(TB_res, 2 * D, itemsize)
                    + 4 * _tile_bytes(TB_res, 1, itemsize))
    resident_needed = tab_bytes_1x + io_bytes_res + (2 << 20)
    fits_resident = resident_needed <= budget
    # Resident re-streams the whole tables from HBM every call; prefer HBM row
    # gathers when the gathered bytes are much smaller than that stream.
    gathered_bytes = 4 * B * D * itemsize
    table_stream_bytes = (2 * num_users + 2 * num_items) * D * itemsize
    prefer_hbm = 4 * gathered_bytes < table_stream_bytes

    if force_path in ("resident", "hbm"):
        path = force_path
    else:
        path = "resident" if (fits_resident and not prefer_hbm) else "hbm"

    tables = (user_embeddings, user_profiles, item_embeddings, item_profiles)
    packed = None

    if path == "resident":
        TB = TB_res
        B_pad = _round_up(B, TB)
        if B_pad != B:
            uidx_p = jnp.pad(uidx, (0, B_pad - B))
            iidx_p = jnp.pad(iidx, (0, B_pad - B))
        else:
            uidx_p, iidx_p = uidx, iidx
        vmem_limit = int(min(vmem_cap,
                             max(resident_needed + (4 << 20), 32 << 20)))
        try:
            if use_mxu:
                packed = _call_resident_mxu(uidx_p[:, None], iidx_p[:, None],
                                            tables, TB, B_pad, dtype,
                                            True, vmem_limit)
            else:
                packed = _call_resident_rows(uidx_p, iidx_p, tables, TB, B_pad,
                                             dtype, True, vmem_limit)
        except Exception:
            # pl.Buffered(1) (single-buffered resident tables) rejected by this
            # jax version: retry with default double-buffered table specs if
            # they still fit, otherwise fall back to the HBM gather path.
            dbl_needed = 2 * tab_bytes_1x + io_bytes_res + (2 << 20)
            if dbl_needed <= budget:
                vmem_limit2 = int(min(vmem_cap,
                                      max(dbl_needed + (4 << 20), 32 << 20)))
                if use_mxu:
                    packed = _call_resident_mxu(uidx_p[:, None],
                                                iidx_p[:, None], tables, TB,
                                                B_pad, dtype, False,
                                                vmem_limit2)
                else:
                    packed = _call_resident_rows(uidx_p, iidx_p, tables, TB,
                                                 B_pad, dtype, False,
                                                 vmem_limit2)
            else:
                path = "hbm"

    if path == "hbm" and packed is None:
        TB = pick_tb(32)
        B_pad = _round_up(B, TB)
        if B_pad != B:
            # Padded tail rows gather row 0 (harmless, clamped) and are
            # discarded by the wrapper slice below.
            uidx_p = jnp.pad(uidx, (0, B_pad - B))
            iidx_p = jnp.pad(iidx, (0, B_pad - B))
        else:
            uidx_p, iidx_p = uidx, iidx
        hbm_needed = (8 * _tile_bytes(TB, D, itemsize)
                      + 2 * _tile_bytes(TB, 2 * D, itemsize) + (2 << 20))
        # Explicit limit: v5e's scoped-VMEM default is only 16 MiB.
        vmem_limit = int(min(vmem_cap, max(hbm_needed + (4 << 20), 32 << 20)))
        packed = _call_hbm(uidx_p, iidx_p, tables, TB, B_pad, dtype, vmem_limit)

    user_features = packed[:B, :D]
    item_features = packed[:B, D:]
    return user_features, item_features


# ----------------------------------------------------------------------------
# Pure-JAX reference (matches torch.mean(torch.stack((e, p, e*p)), dim=0))
# ----------------------------------------------------------------------------

def _reference(user_indices, item_indices, ue, ie, up, ip):
    u_e = ue[user_indices]
    i_e = ie[item_indices]
    u_p = up[user_indices]
    i_p = ip[item_indices]
    user_features = jnp.mean(jnp.stack((u_e, u_p, u_e * u_p)), axis=0)
    item_features = jnp.mean(jnp.stack((i_e, i_p, i_e * i_p)), axis=0)
    return user_features, item_features


if __name__ == "__main__":
    key = jax.random.PRNGKey(0)
    k1, k2, k3, k4, k5, k6 = jax.random.split(key, 6)

    num_users, num_items, D, B = 16, 24, 32, 8

    user_embeddings = jax.random.normal(k1, (num_users, D), dtype=jnp.float32)
    item_embeddings = jax.random.normal(k2, (num_items, D), dtype=jnp.float32)
    user_profiles = jax.random.normal(k3, (num_users, D), dtype=jnp.float32)
    item_profiles = jax.random.normal(k4, (num_items, D), dtype=jnp.float32)

    user_indices = jax.random.randint(k5, (B,), 0, num_users, dtype=jnp.int32)
    item_indices = jax.random.randint(k6, (B,), 0, num_items, dtype=jnp.int32)

    uf_ref, if_ref = _reference(user_indices, item_indices,
                                user_embeddings, item_embeddings,
                                user_profiles, item_profiles)

    # 1) Auto dispatch: tiny tables -> resident path with MXU one-hot gather.
    uf, itf = embedding_model_forward(
        user_indices, item_indices,
        user_embeddings, item_embeddings,
        user_profiles, item_profiles)
    jax.block_until_ready((uf, itf))
    assert uf.shape == (B, D) and itf.shape == (B, D)
    assert jnp.allclose(uf, uf_ref, atol=1e-6)
    assert jnp.allclose(itf, if_ref, atol=1e-6)

    # 2) Resident per-row gather variant (MXU one-hot disabled).
    uf2, itf2 = embedding_model_forward(
        user_indices, item_indices,
        user_embeddings, item_embeddings,
        user_profiles, item_profiles,
        force_path="resident", onehot_max_rows=0)
    jax.block_until_ready((uf2, itf2))
    assert jnp.allclose(uf2, uf_ref, atol=1e-6)
    assert jnp.allclose(itf2, if_ref, atol=1e-6)

    # 3) HBM row-gather path with several grid steps to exercise the
    #    cross-step DMA prefetch + aggregate waits.
    B2 = 40
    k7, k8 = jax.random.split(k6, 2)
    ui2 = jax.random.randint(k7, (B2,), 0, num_users, dtype=jnp.int32)
    ii2 = jax.random.randint(k8, (B2,), 0, num_items, dtype=jnp.int32)
    uf3_ref, if3_ref = _reference(ui2, ii2,
                                  user_embeddings, item_embeddings,
                                  user_profiles, item_profiles)
    uf3, itf3 = embedding_model_forward(
        ui2, ii2,
        user_embeddings, item_embeddings,
        user_profiles, item_profiles,
        force_path="hbm", block_rows=8)
    jax.block_until_ready((uf3, itf3))
    assert uf3.shape == (B2, D) and itf3.shape == (B2, D)
    assert jnp.allclose(uf3, uf3_ref, atol=1e-6)
    assert jnp.allclose(itf3, if3_ref, atol=1e-6)

    print("KERNEL_OK")
</pallas_src>

<mosaic_0001>
module attributes {stable_mosaic.version = 11 : i64} {
  func.func @_resident_mxu_kernel(%arg0: i32, %arg1: memref<8x1xi32, #tpu.memory_space<vmem>>, %arg2: memref<8x1xi32, #tpu.memory_space<vmem>>, %arg3: memref<16x32xf32, #tpu.memory_space<vmem>>, %arg4: memref<16x32xf32, #tpu.memory_space<vmem>>, %arg5: memref<24x32xf32, #tpu.memory_space<vmem>>, %arg6: memref<24x32xf32, #tpu.memory_space<vmem>>, %arg7: memref<8x64xf32, #tpu.memory_space<vmem>>) attributes {dimension_semantics = [#tpu.dimension_semantics<parallel>], iteration_bounds = array<i64: 1>, scalar_prefetch = 0 : i64, scratch_operands = 0 : i64, tpu.core_type = #tpu.core_type<tc>, window_params = [{transform_indices = @transform_0, window_bounds = array<i64: 8, 1>}, {transform_indices = @transform_1, window_bounds = array<i64: 8, 1>}, {pipeline_mode = #tpu.pipeline_mode<synchronous>, transform_indices = @transform_2, window_bounds = array<i64: 16, 32>}, {pipeline_mode = #tpu.pipeline_mode<synchronous>, transform_indices = @transform_3, window_bounds = array<i64: 16, 32>}, {pipeline_mode = #tpu.pipeline_mode<synchronous>, transform_indices = @transform_4, window_bounds = array<i64: 24, 32>}, {pipeline_mode = #tpu.pipeline_mode<synchronous>, transform_indices = @transform_5, window_bounds = array<i64: 24, 32>}, {transform_indices = @transform_6, window_bounds = array<i64: 8, 64>}]} {
    %c0 = arith.constant 0 : index
    %c0_0 = arith.constant 0 : index
    %0 = vector.load %arg1[%c0, %c0_0] : memref<8x1xi32, #tpu.memory_space<vmem>>, vector<8x1xi32>
    %c0_1 = arith.constant 0 : index
    %c0_2 = arith.constant 0 : index
    %1 = vector.load %arg2[%c0_1, %c0_2] : memref<8x1xi32, #tpu.memory_space<vmem>>, vector<8x1xi32>
    %2 = tpu.iota {dimensions = array<i32: 1>} : vector<8x16xi32>
    %3 = vector.broadcast %0 : vector<8x1xi32> to vector<8x16xi32>
    %4 = arith.cmpi eq, %2, %3 : vector<8x16xi32>
    %5 = arith.extui %4 : vector<8x16xi1> to vector<8x16xi32>
    %6 = arith.sitofp %5 : vector<8x16xi32> to vector<8x16xf32>
    %7 = tpu.iota {dimensions = array<i32: 1>} : vector<8x24xi32>
    %8 = vector.broadcast %1 : vector<8x1xi32> to vector<8x24xi32>
    %9 = arith.cmpi eq, %7, %8 : vector<8x24xi32>
    %10 = arith.extui %9 : vector<8x24xi1> to vector<8x24xi32>
    %11 = arith.sitofp %10 : vector<8x24xi32> to vector<8x24xf32>
    %c0_3 = arith.constant 0 : index
    %c0_4 = arith.constant 0 : index
    %12 = vector.load %arg3[%c0_3, %c0_4] : memref<16x32xf32, #tpu.memory_space<vmem>>, vector<16x32xf32>
    %cst = arith.constant dense<0.000000e+00> : vector<8x32xf32>
    %13 = tpu.matmul %6, %12, %cst {dimension_numbers = #tpu.dot_dimension_numbers<[1], [0], [0], [1], [0, 0, 1, 1], [], []>} : vector<8x16xf32>, vector<16x32xf32>, vector<8x32xf32> -> vector<8x32xf32>
    %c0_5 = arith.constant 0 : index
    %c0_6 = arith.constant 0 : index
    %14 = vector.load %arg4[%c0_5, %c0_6] : memref<16x32xf32, #tpu.memory_space<vmem>>, vector<16x32xf32>
    %cst_7 = arith.constant dense<0.000000e+00> : vector<8x32xf32>
    %15 = tpu.matmul %6, %14, %cst_7 {dimension_numbers = #tpu.dot_dimension_numbers<[1], [0], [0], [1], [0, 0, 1, 1], [], []>} : vector<8x16xf32>, vector<16x32xf32>, vector<8x32xf32> -> vector<8x32xf32>
    %c0_8 = arith.constant 0 : index
    %c0_9 = arith.constant 0 : index
    %16 = vector.load %arg5[%c0_8, %c0_9] : memref<24x32xf32, #tpu.memory_space<vmem>>, vector<24x32xf32>
    %cst_10 = arith.constant dense<0.000000e+00> : vector<8x32xf32>
    %17 = tpu.matmul %11, %16, %cst_10 {dimension_numbers = #tpu.dot_dimension_numbers<[1], [0], [0], [1], [0, 0, 1, 1], [], []>} : vector<8x24xf32>, vector<24x32xf32>, vector<8x32xf32> -> vector<8x32xf32>
    %c0_11 = arith.constant 0 : index
    %c0_12 = arith.constant 0 : index
    %18 = vector.load %arg6[%c0_11, %c0_12] : memref<24x32xf32, #tpu.memory_space<vmem>>, vector<24x32xf32>
    %cst_13 = arith.constant dense<0.000000e+00> : vector<8x32xf32>
    %19 = tpu.matmul %11, %18, %cst_13 {dimension_numbers = #tpu.dot_dimension_numbers<[1], [0], [0], [1], [0, 0, 1, 1], [], []>} : vector<8x24xf32>, vector<24x32xf32>, vector<8x32xf32> -> vector<8x32xf32>
    %20 = arith.addf %13, %15 : vector<8x32xf32>
    %21 = arith.mulf %13, %15 : vector<8x32xf32>
    %22 = arith.addf %20, %21 : vector<8x32xf32>
    %23 = arith.addf %17, %19 : vector<8x32xf32>
    %24 = arith.mulf %17, %19 : vector<8x32xf32>
    %25 = arith.addf %23, %24 : vector<8x32xf32>
    %26 = tpu.concatenate %22, %25 in 1 : vector<8x32xf32>, vector<8x32xf32> -> vector<8x64xf32>
    %cst_14 = arith.constant 0.333333343 : f32
    %27 = vector.broadcast %cst_14 : f32 to vector<8x64xf32>
    %28 = arith.mulf %26, %27 : vector<8x64xf32>
    %c0_15 = arith.constant 0 : index
    %c0_16 = arith.constant 0 : index
    %29 = vector.load %arg7[%c0_15, %c0_16] : memref<8x64xf32, #tpu.memory_space<vmem>>, vector<8x64xf32>
    tpu.vector_store %arg7[%c0_15, %c0_16], %28 {strides = array<i32>} : memref<8x64xf32, #tpu.memory_space<vmem>>, vector<8x64xf32>,
    return
  }
  func.func @transform_0(%arg0: i32) -> (i32, i32) {
    %c0_i32 = arith.constant 0 : i32
    %c0_i32_0 = arith.constant 0 : i32
    return %arg0, %c0_i32 : i32, i32
  }
  func.func @transform_1(%arg0: i32) -> (i32, i32) {
    %c0_i32 = arith.constant 0 : i32
    %c0_i32_0 = arith.constant 0 : i32
    return %arg0, %c0_i32 : i32, i32
  }
  func.func @transform_2(%arg0: i32) -> (i32, i32) {
    %c0_i32 = arith.constant 0 : i32
    %c0_i32_0 = arith.constant 0 : i32
    %c0_i32_1 = arith.constant 0 : i32
    return %c0_i32, %c0_i32_0 : i32, i32
  }
  func.func @transform_3(%arg0: i32) -> (i32, i32) {
    %c0_i32 = arith.constant 0 : i32
    %c0_i32_0 = arith.constant 0 : i32
    %c0_i32_1 = arith.constant 0 : i32
    return %c0_i32, %c0_i32_0 : i32, i32
  }
  func.func @transform_4(%arg0: i32) -> (i32, i32) {
    %c0_i32 = arith.constant 0 : i32
    %c0_i32_0 = arith.constant 0 : i32
    %c0_i32_1 = arith.constant 0 : i32
    return %c0_i32, %c0_i32_0 : i32, i32
  }
  func.func @transform_5(%arg0: i32) -> (i32, i32) {
    %c0_i32 = arith.constant 0 : i32
    %c0_i32_0 = arith.constant 0 : i32
    %c0_i32_1 = arith.constant 0 : i32
    return %c0_i32, %c0_i32_0 : i32, i32
  }
  func.func @transform_6(%arg0: i32) -> (i32, i32) {
    %c0_i32 = arith.constant 0 : i32
    %c0_i32_0 = arith.constant 0 : i32
    return %arg0, %c0_i32 : i32, i32
  }
}

module attributes {stable_mosaic.version = 11 : i64} {
  func.func @_resident_mxu_kernel(%arg0: i32, %arg1: memref<8x1xi32, #tpu.memory_space<vmem>>, %arg2: memref<8x1xi32, #tpu.memory_space<vmem>>, %arg3: memref<16x32xf32, #tpu.memory_space<vmem>>, %arg4: memref<16x32xf32, #tpu.memory_space<vmem>>, %arg5: memref<24x32xf32, #tpu.memory_space<vmem>>, %arg6: memref<24x32xf32, #tpu.memory_space<vmem>>, %arg7: memref<8x64xf32, #tpu.memory_space<vmem>>) attributes {dimension_semantics = [#tpu.dimension_semantics<parallel>], iteration_bounds = array<i64: 1>, scalar_prefetch = 0 : i64, scratch_operands = 0 : i64, tpu.core_type = #tpu.core_type<tc>, window_params = [{transform_indices = @transform_0, window_bounds = array<i64: 8, 1>}, {transform_indices = @transform_1, window_bounds = array<i64: 8, 1>}, {pipeline_mode = #tpu.pipeline_mode<synchronous>, transform_indices = @transform_2, window_bounds = array<i64: 16, 32>}, {pipeline_mode = #tpu.pipeline_mode<synchronous>, transform_indices = @transform_3, window_bounds = array<i64: 16, 32>}, {pipeline_mode = #tpu.pipeline_mode<synchronous>, transform_indices = @transform_4, window_bounds = array<i64: 24, 32>}, {pipeline_mode = #tpu.pipeline_mode<synchronous>, transform_indices = @transform_5, window_bounds = array<i64: 24, 32>}, {transform_indices = @transform_6, window_bounds = array<i64: 8, 64>}]} {
    %c0 = arith.constant 0 : index
    %c0_0 = arith.constant 0 : index
    %0 = vector.load %arg1[%c0, %c0_0] : memref<8x1xi32, #tpu.memory_space<vmem>>, vector<8x1xi32>
    %c0_1 = arith.constant 0 : index
    %c0_2 = arith.constant 0 : index
    %1 = vector.load %arg2[%c0_1, %c0_2] : memref<8x1xi32, #tpu.memory_space<vmem>>, vector<8x1xi32>
    %2 = tpu.iota {dimensions = array<i32: 1>} : vector<8x16xi32>
    %3 = vector.broadcast %0 : vector<8x1xi32> to vector<8x16xi32>
    %4 = arith.cmpi eq, %2, %3 : vector<8x16xi32>
    %5 = arith.extui %4 : vector<8x16xi1> to vector<8x16xi32>
    %6 = arith.sitofp %5 : vector<8x16xi32> to vector<8x16xf32>
    %7 = tpu.iota {dimensions = array<i32: 1>} : vector<8x24xi32>
    %8 = vector.broadcast %1 : vector<8x1xi32> to vector<8x24xi32>
    %9 = arith.cmpi eq, %7, %8 : vector<8x24xi32>
    %10 = arith.extui %9 : vector<8x24xi1> to vector<8x24xi32>
    %11 = arith.sitofp %10 : vector<8x24xi32> to vector<8x24xf32>
    %c0_3 = arith.constant 0 : index
    %c0_4 = arith.constant 0 : index
    %12 = vector.load %arg3[%c0_3, %c0_4] : memref<16x32xf32, #tpu.memory_space<vmem>>, vector<16x32xf32>
    %cst = arith.constant dense<0.000000e+00> : vector<8x32xf32>
    %13 = tpu.matmul %6, %12, %cst {dimension_numbers = #tpu.dot_dimension_numbers<[1], [0], [0], [1], [0, 0, 1, 1], [], []>} : vector<8x16xf32>, vector<16x32xf32>, vector<8x32xf32> -> vector<8x32xf32>
    %c0_5 = arith.constant 0 : index
    %c0_6 = arith.constant 0 : index
    %14 = vector.load %arg4[%c0_5, %c0_6] : memref<16x32xf32, #tpu.memory_space<vmem>>, vector<16x32xf32>
    %cst_7 = arith.constant dense<0.000000e+00> : vector<8x32xf32>
    %15 = tpu.matmul %6, %14, %cst_7 {dimension_numbers = #tpu.dot_dimension_numbers<[1], [0], [0], [1], [0, 0, 1, 1], [], []>} : vector<8x16xf32>, vector<16x32xf32>, vector<8x32xf32> -> vector<8x32xf32>
    %c0_8 = arith.constant 0 : index
    %c0_9 = arith.constant 0 : index
    %16 = vector.load %arg5[%c0_8, %c0_9] : memref<24x32xf32, #tpu.memory_space<vmem>>, vector<24x32xf32>
    %cst_10 = arith.constant dense<0.000000e+00> : vector<8x32xf32>
    %17 = tpu.matmul %11, %16, %cst_10 {dimension_numbers = #tpu.dot_dimension_numbers<[1], [0], [0], [1], [0, 0, 1, 1], [], []>} : vector<8x24xf32>, vector<24x32xf32>, vector<8x32xf32> -> vector<8x32xf32>
    %c0_11 = arith.constant 0 : index
    %c0_12 = arith.constant 0 : index
    %18 = vector.load %arg6[%c0_11, %c0_12] : memref<24x32xf32, #tpu.memory_space<vmem>>, vector<24x32xf32>
    %cst_13 = arith.constant dense<0.000000e+00> : vector<8x32xf32>
    %19 = tpu.matmul %11, %18, %cst_13 {dimension_numbers = #tpu.dot_dimension_numbers<[1], [0], [0], [1], [0, 0, 1, 1], [], []>} : vector<8x24xf32>, vector<24x32xf32>, vector<8x32xf32> -> vector<8x32xf32>
    %20 = arith.addf %13, %15 : vector<8x32xf32>
    %21 = arith.mulf %13, %15 : vector<8x32xf32>
    %22 = arith.addf %20, %21 : vector<8x32xf32>
    %23 = arith.addf %17, %19 : vector<8x32xf32>
    %24 = arith.mulf %17, %19 : vector<8x32xf32>
    %25 = arith.addf %23, %24 : vector<8x32xf32>
    %26 = tpu.concatenate %22, %25 in 1 : vector<8x32xf32>, vector<8x32xf32> -> vector<8x64xf32>
    %cst_14 = arith.constant 0.333333343 : f32
    %27 = vector.broadcast %cst_14 : f32 to vector<8x64xf32>
    %28 = arith.mulf %26, %27 : vector<8x64xf32>
    %c0_15 = arith.constant 0 : index
    %c0_16 = arith.constant 0 : index
    %29 = vector.load %arg7[%c0_15, %c0_16] : memref<8x64xf32, #tpu.memory_space<vmem>>, vector<8x64xf32>
    tpu.vector_store %arg7[%c0_15, %c0_16], %28 {strides = array<i32>} : memref<8x64xf32, #tpu.memory_space<vmem>>, vector<8x64xf32>,
    return
  }
  func.func @transform_0(%arg0: i32) -> (i32, i32) {
    %c0_i32 = arith.constant 0 : i32
    %c0_i32_0 = arith.constant 0 : i32
    return %arg0, %c0_i32 : i32, i32
  }
  func.func @transform_1(%arg0: i32) -> (i32, i32) {
    %c0_i32 = arith.constant 0 : i32
    %c0_i32_0 = arith.constant 0 : i32
    return %arg0, %c0_i32 : i32, i32
  }
  func.func @transform_2(%arg0: i32) -> (i32, i32) {
    %c0_i32 = arith.constant 0 : i32
    %c0_i32_0 = arith.constant 0 : i32
    %c0_i32_1 = arith.constant 0 : i32
    return %c0_i32, %c0_i32_0 : i32, i32
  }
  func.func @transform_3(%arg0: i32) -> (i32, i32) {
    %c0_i32 = arith.constant 0 : i32
    %c0_i32_0 = arith.constant 0 : i32
    %c0_i32_1 = arith.constant 0 : i32
    return %c0_i32, %c0_i32_0 : i32, i32
  }
  func.func @transform_4(%arg0: i32) -> (i32, i32) {
    %c0_i32 = arith.constant 0 : i32
    %c0_i32_0 = arith.constant 0 : i32
    %c0_i32_1 = arith.constant 0 : i32
    return %c0_i32, %c0_i32_0 : i32, i32
  }
  func.func @transform_5(%arg0: i32) -> (i32, i32) {
    %c0_i32 = arith.constant 0 : i32
    %c0_i32_0 = arith.constant 0 : i32
    %c0_i32_1 = arith.constant 0 : i32
    return %c0_i32, %c0_i32_0 : i32, i32
  }
  func.func @transform_6(%arg0: i32) -> (i32, i32) {
    %c0_i32 = arith.constant 0 : i32
    %c0_i32_0 = arith.constant 0 : i32
    return %arg0, %c0_i32 : i32, i32
  }
}

</mosaic_0001>

<llo_original>
// kernel: tpu_custom_call.1
$region0: #{tpu_custom_call.1}
  #allocation0 [shape = 'u32[]', space=smem, size = 0x4, offset = 0x4, fixed_abs, tag = 'smem constant byte address 0x4 - core index']
  #allocation1 [shape = 'u32[72,128]{1,0:T(1,128)}', space=vmem, size = 0x9000, scoped, tag = 'internal scratch']
  %s0 = inlined_call_operand.vmem [shape: s32[8,1], index: 0, kind: input, shape index: {}]
  %s1 = inlined_call_operand.vmem [shape: s32[8,1], index: 1, kind: input, shape index: {}]
  %s2 = inlined_call_operand.vmem [shape: f32[16,32], index: 2, kind: input, shape index: {}]
  %s3 = inlined_call_operand.hbm [shape: f32[16,32], index: 3, kind: input, shape index: {}]
  %s4 = inlined_call_operand.hbm [shape: f32[24,32], index: 4, kind: input, shape index: {}]
  %s5 = inlined_call_operand.hbm [shape: f32[24,32], index: 5, kind: input, shape index: {}]
  %s6 = inlined_call_operand.hbm [shape: f32[8,64], index: 6, kind: output, shape index: {}]
  %s7 = sld [smem:[#allocation0]]
  $region46: #{tpu_custom_call.1} parent=0
    _
  %s9 = ssub.s32 1, %s7
  %s10 = scalar_select 0, %s9, %s7
  $region1: #{tpu_custom_call.1} parent=0
    #allocation2 [shape = 'u8[8192]{0}', space=vmem, size = 0x2000, scoped, tag = 'input window, operand 3, single buffered']
    #allocation3 [shape = 's32[1]{0}', space=sflag, size = 0x4, scoped, tag = 'scoped memory for tpu_custom_call.1']
    #allocation4 [shape = 's32[1]{0}', space=sflag, size = 0x4, scoped, tag = 'scoped memory for tpu_custom_call.1']
    #allocation5 [shape = 'u8[12288]{0}', space=vmem, size = 0x3000, scoped, tag = 'input window, operand 4, single buffered']
    #allocation6 [shape = 's32[1]{0}', space=sflag, size = 0x4, scoped, tag = 'scoped memory for tpu_custom_call.1']
    #allocation7 [shape = 'u8[12288]{0}', space=vmem, size = 0x3000, scoped, tag = 'input window, operand 5, single buffered']
    #allocation8 [shape = 'u8[4096]{0}', space=vmem, size = 0x1000, scoped, tag = 'output window, operand 0, single buffered']
    %11 = vsyncpa [#allocation3], 0
    %12 = vsyncpa [#allocation6], 0
    %13 = vsyncpa [#allocation4], 0
    // Predicated region
    $region2: #{tpu_custom_call.1} parent=1 // pred_check
      _
    $region3: #{tpu_custom_call.1} parent=1 // pred_check_branch
      %15 = sbr.rel (0) target = $region5
    $region4: #{tpu_custom_call.1} parent=1 // pred_region
      _
    $region5: #{tpu_custom_call.1} parent=1 // pred_fallthru
      _
    // Predicated region
    $region6: #{tpu_custom_call.1} parent=1 // pred_check
      _
    $region7: #{tpu_custom_call.1} parent=1 // pred_check_branch
      %17 = sbr.rel (0) target = $region9
    $region8: #{tpu_custom_call.1} parent=1 // pred_region
      _
    $region9: #{tpu_custom_call.1} parent=1 // pred_fallthru
      _
    // Predicated region
    $region10: #{tpu_custom_call.1} parent=1 // pred_check
      _
    $region11: #{tpu_custom_call.1} parent=1 // pred_check_branch
      %19 = sbr.rel (0) target = $region13
    $region12: #{tpu_custom_call.1} parent=1 // pred_region
      _
    $region13: #{tpu_custom_call.1} parent=1 // pred_fallthru
      _
    // Predicated region
    $region14: #{tpu_custom_call.1} parent=1 // pred_check
      _
    $region15: #{tpu_custom_call.1} parent=1 // pred_check_branch
      %21 = sbr.rel (0) target = $region17
    $region16: #{tpu_custom_call.1} parent=1 // pred_region
      %23 = vsyncadd [#allocation3], 0
      %s24 = sshll.u32 %s3, 4
      %s25 = int_to_ptr.hbm [resolvable:$true] %s24
      %s26 = sshll.u32 [#allocation2], 4
      %s27 = int_to_ptr.vmem [resolvable:$true] %s26
      %32 = dma.hbm_to_vmem [thread:$0]  %s25, 256, %s27, [#allocation3], 128, 128, 8
    $region17: #{tpu_custom_call.1} parent=1 // pred_fallthru
      _
    // Predicated region
    $region18: #{tpu_custom_call.1} parent=1 // pred_check
      _
    $region19: #{tpu_custom_call.1} parent=1 // pred_check_branch
      %34 = sbr.rel (0) target = $region21
    $region20: #{tpu_custom_call.1} parent=1 // pred_region
      %36 = vsyncadd [#allocation6], 0
      %s37 = sshll.u32 %s4, 4
      %s38 = int_to_ptr.hbm [resolvable:$true] %s37
      %s39 = sshll.u32 [#allocation5], 4
      %s40 = int_to_ptr.vmem [resolvable:$true] %s39
      %45 = dma.hbm_to_vmem [thread:$0]  %s38, 384, %s40, [#allocation6], 128, 128, 8
    $region21: #{tpu_custom_call.1} parent=1 // pred_fallthru
      _
    // Predicated region
    $region22: #{tpu_custom_call.1} parent=1 // pred_check
      _
    $region23: #{tpu_custom_call.1} parent=1 // pred_check_branch
      %47 = sbr.rel (0) target = $region25
    $region24: #{tpu_custom_call.1} parent=1 // pred_region
      %49 = vsyncadd [#allocation6], 0
      %s50 = sshll.u32 %s5, 4
      %s51 = int_to_ptr.hbm [resolvable:$true] %s50
      %s52 = sshll.u32 [#allocation7], 4
      %s53 = int_to_ptr.vmem [resolvable:$true] %s52
      %58 = dma.hbm_to_vmem [thread:$0]  %s51, 384, %s53, [#allocation6], 128, 128, 8
    $region25: #{tpu_custom_call.1} parent=1 // pred_fallthru
      _
    // Predicated region
    $region26: #{tpu_custom_call.1} parent=1 // pred_check
      _
    $region27: #{tpu_custom_call.1} parent=1 // pred_check_branch
      %60 = sbr.rel (0) target = $region29
    $region28: #{tpu_custom_call.1} parent=1 // pred_region
      %62 = dma.done [#allocation3], 256
    $region29: #{tpu_custom_call.1} parent=1 // pred_fallthru
      _
    // Predicated region
    $region30: #{tpu_custom_call.1} parent=1 // pred_check
      _
    $region31: #{tpu_custom_call.1} parent=1 // pred_check_branch
      %64 = sbr.rel (0) target = $region33
    $region32: #{tpu_custom_call.1} parent=1 // pred_region
      %66 = dma.done [#allocation6], 384
    $region33: #{tpu_custom_call.1} parent=1 // pred_fallthru
      _
    // Predicated region
    $region34: #{tpu_custom_call.1} parent=1 // pred_check
      _
    $region35: #{tpu_custom_call.1} parent=1 // pred_check_branch
      %68 = sbr.rel (0) target = $region37
    $region36: #{tpu_custom_call.1} parent=1 // pred_region
      %70 = dma.done [#allocation6], 384
    $region37: #{tpu_custom_call.1} parent=1 // pred_fallthru
      _
    %v71 = vld [vmem:[%s0] sm:$0xff]
    %v72 = vld [vmem:[%s1] sm:$0xff]
    %v73 = vlaneseq
    %v74 = vand.u32 %v73, 127
    %75 = vset.pattern.permute.xlu0 0
    %76 = vperm.xlu0 %75, %v71
    %v77 = vpop.permute.xlu0 %76
    %vm78 = vcmp.eq.s32.totalorder %v74, %v77
    %v79 = vsel %vm78, 1, 0
    %v80 = vcvt.s32.f32 %v79
    %81 = vset.pattern.permute.xlu0 0
    %82 = vperm.xlu0 %81, %v72
    %v83 = vpop.permute.xlu0 %82
    %vm84 = vcmp.eq.s32.totalorder %v74, %v83
    %v85 = vsel %vm84, 1, 0
    %v86 = vcvt.s32.f32 %v85
    %v87 = vld [vmem:[%s2] sm:$0xff]
    %v88 = vld [vmem:[%s2 + $0x8] sm:$0xff]
    %vm89 = vcmask 130048
    %v91 = vsel %vm89, %v80, 0
    %93 = vmatpush.msra.mxu0 0.0
    %94 = vmatpush.msra.mxu0 0.0
    %95 = vmatpush.msra.mxu0 0.0
    %96 = vmatpush.msra.mxu0 0.0
    %97 = vmatpush.msra.mxu0 0.0
    %98 = vmatpush.msra.mxu0 0.0
    %99 = vmatpush.msra.mxu0 0.0
    %100 = vmatpush.msra.mxu0 0.0
    %101 = vmatpush.msra.mxu0 0.0
    %102 = vmatpush.msra.mxu0 0.0
    %103 = vmatpush.msra.mxu0 0.0
    %104 = vmatpush.msra.mxu0 0.0
    %105 = vmatpush.msra.mxu0 0.0
    %106 = vmatpush.msra.mxu0 0.0
    %107 = vmatpush.msra.mxu0 %v88
    %108 = vmatpush.msra.mxu0 %v87
    %109 = vmatmul.f32.gmra.mxu0 %v91
    %v110 = vpop.f32.mrf.mxu0
    %v111 = vadd.f32 0.0, %v110
    %112 = vdwg.mxu0
    %v113 = vld [vmem:[#allocation2] sm:$0xff]
    %v114 = vld [vmem:[#allocation2 + $0x8] sm:$0xff]
    %115 = vmatpush.msra.mxu0 0.0
    %116 = vmatpush.msra.mxu0 0.0
    %117 = vmatpush.msra.mxu0 0.0
    %118 = vmatpush.msra.mxu0 0.0
    %119 = vmatpush.msra.mxu0 0.0
    %120 = vmatpush.msra.mxu0 0.0
    %121 = vmatpush.msra.mxu0 0.0
    %122 = vmatpush.msra.mxu0 0.0
    %123 = vmatpush.msra.mxu0 0.0
    %124 = vmatpush.msra.mxu0 0.0
    %125 = vmatpush.msra.mxu0 0.0
    %126 = vmatpush.msra.mxu0 0.0
    %127 = vmatpush.msra.mxu0 0.0
    %128 = vmatpush.msra.mxu0 0.0
    %129 = vmatpush.msra.mxu0 %v114
    %130 = vmatpush.msra.mxu0 %v113
    %131 = vmatmul.f32.gmra.mxu0 %v91
    %v132 = vpop.f32.mrf.mxu0
    %v133 = vadd.f32 0.0, %v132
    %134 = vdwg.mxu0
    %v135 = vld [vmem:[#allocation5] sm:$0xff]
    %v136 = vld [vmem:[#allocation5 + $0x8] sm:$0xff]
    %v137 = vld [vmem:[#allocation5 + $0x10] sm:$0xff]
    %vm138 = vcmask 195584
    %v140 = vsel %vm138, %v86, 0
    %142 = vmatpush.msra.mxu0 0.0
    %143 = vmatpush.msra.mxu0 0.0
    %144 = vmatpush.msra.mxu0 0.0
    %145 = vmatpush.msra.mxu0 0.0
    %146 = vmatpush.msra.mxu0 0.0
    %147 = vmatpush.msra.mxu0 0.0
    %148 = vmatpush.msra.mxu0 0.0
    %149 = vmatpush.msra.mxu0 0.0
    %150 = vmatpush.msra.mxu0 0.0
    %151 = vmatpush.msra.mxu0 0.0
    %152 = vmatpush.msra.mxu0 0.0
    %153 = vmatpush.msra.mxu0 0.0
    %154 = vmatpush.msra.mxu0 0.0
    %155 = vmatpush.msra.mxu0 %v137
    %156 = vmatpush.msra.mxu0 %v136
    %157 = vmatpush.msra.mxu0 %v135
    %158 = vmatmul.f32.gmra.mxu0 %v140
    %v159 = vpop.f32.mrf.mxu0
    %v160 = vadd.f32 0.0, %v159
    %161 = vdwg.mxu0
    %v162 = vld [vmem:[#allocation7] sm:$0xff]
    %v163 = vld [vmem:[#allocation7 + $0x8] sm:$0xff]
    %v164 = vld [vmem:[#allocation7 + $0x10] sm:$0xff]
    %165 = vmatpush.msra.mxu0 0.0
    %166 = vmatpush.msra.mxu0 0.0
    %167 = vmatpush.msra.mxu0 0.0
    %168 = vmatpush.msra.mxu0 0.0
    %169 = vmatpush.msra.mxu0 0.0
    %170 = vmatpush.msra.mxu0 0.0
    %171 = vmatpush.msra.mxu0 0.0
    %172 = vmatpush.msra.mxu0 0.0
    %173 = vmatpush.msra.mxu0 0.0
    %174 = vmatpush.msra.mxu0 0.0
    %175 = vmatpush.msra.mxu0 0.0
    %176 = vmatpush.msra.mxu0 0.0
    %177 = vmatpush.msra.mxu0 0.0
    %178 = vmatpush.msra.mxu0 %v164
    %179 = vmatpush.msra.mxu0 %v163
    %180 = vmatpush.msra.mxu0 %v162
    %181 = vmatmul.f32.gmra.mxu0 %v140
    %v182 = vpop.f32.mrf.mxu0
    %v183 = vadd.f32 0.0, %v182
    %184 = vdwg.mxu0
    %v185 = vadd.f32 %v111, %v133
    %v186 = vmul.f32 %v111, %v133
    %v187 = vadd.f32 %v185, %v186
    %v188 = vadd.f32 %v160, %v183
    %v189 = vmul.f32 %v160, %v183
    %v190 = vadd.f32 %v188, %v189
    %192 = vrot.lane.b32.xlu0 %v190, 32
    %v193 = vpop.permute.xlu0 %192
    %vm195 = vcmask 261120
    %v196 = vsel %vm195, %v187, %v193
    %v197 = vmul.f32 %v196, 0.33333334
    %vm198 = vcmask 523264
    %199 = vst.msk [vmem:[#allocation8] sm:$0xff] %vm198, %v197
    // Predicated region
    $region38: #{tpu_custom_call.1} parent=1 // pred_check
      _
    $region39: #{tpu_custom_call.1} parent=1 // pred_check_branch
      %201 = sbr.rel (0) target = $region41
    $region40: #{tpu_custom_call.1} parent=1 // pred_region
      %203 = vsyncadd [#allocation4], 0
      %s205 = sshll.u32 [#allocation8], 4
      %s206 = int_to_ptr.vmem [resolvable:$true] %s205
      %s207 = sshll.u32 %s6, 4
      %s208 = int_to_ptr.hbm [resolvable:$true] %s207
      %210 = dma.vmem_to_hbm [thread:$0]  %s206, 128, %s208, [#allocation4]
    $region41: #{tpu_custom_call.1} parent=1 // pred_fallthru
      _
    // Predicated region
    $region42: #{tpu_custom_call.1} parent=1 // pred_check
      _
    $region43: #{tpu_custom_call.1} parent=1 // pred_check_branch
      %212 = sbr.rel (0) target = $region45
    $region44: #{tpu_custom_call.1} parent=1 // pred_region
      %214 = dma.done [#allocation4], 128
    $region45: #{tpu_custom_call.1} parent=1 // pred_fallthru
      _
    %215 = vsyncpa [#allocation3], 1
    %216 = vsyncpa [#allocation6], 1
    %217 = vsyncpa [#allocation4], 1

// kernel: tpu_custom_call.1
$region0: #{tpu_custom_call.1}
  #allocation0 [shape = 'u32[]', space=smem, size = 0x4, offset = 0x4, fixed_abs, tag = 'smem constant byte address 0x4 - core index']
  #allocation1 [shape = 'u32[72,128]{1,0:T(1,128)}', space=vmem, size = 0x9000, scoped, tag = 'internal scratch']
  %s0 = inlined_call_operand.vmem [shape: s32[8,1], index: 0, kind: input, shape index: {}]
  %s1 = inlined_call_operand.vmem [shape: s32[8,1], index: 1, kind: input, shape index: {}]
  %s2 = inlined_call_operand.vmem [shape: f32[16,32], index: 2, kind: input, shape index: {}]
  %s3 = inlined_call_operand.hbm [shape: f32[16,32], index: 3, kind: input, shape index: {}]
  %s4 = inlined_call_operand.hbm [shape: f32[24,32], index: 4, kind: input, shape index: {}]
  %s5 = inlined_call_operand.hbm [shape: f32[24,32], index: 5, kind: input, shape index: {}]
  %s6 = inlined_call_operand.hbm [shape: f32[8,64], index: 6, kind: output, shape index: {}]
  %s7 = sld [smem:[#allocation0]]
  $region46: #{tpu_custom_call.1} parent=0
    _
  %s9 = ssub.s32 1, %s7
  %s10 = scalar_select 0, %s9, %s7
  $region1: #{tpu_custom_call.1} parent=0
    #allocation2 [shape = 'u8[8192]{0}', space=vmem, size = 0x2000, scoped, tag = 'input window, operand 3, single buffered']
    #allocation3 [shape = 's32[1]{0}', space=sflag, size = 0x4, scoped, tag = 'scoped memory for tpu_custom_call.1']
    #allocation4 [shape = 's32[1]{0}', space=sflag, size = 0x4, scoped, tag = 'scoped memory for tpu_custom_call.1']
    #allocation5 [shape = 'u8[12288]{0}', space=vmem, size = 0x3000, scoped, tag = 'input window, operand 4, single buffered']
    #allocation6 [shape = 's32[1]{0}', space=sflag, size = 0x4, scoped, tag = 'scoped memory for tpu_custom_call.1']
    #allocation7 [shape = 'u8[12288]{0}', space=vmem, size = 0x3000, scoped, tag = 'input window, operand 5, single buffered']
    #allocation8 [shape = 'u8[4096]{0}', space=vmem, size = 0x1000, scoped, tag = 'output window, operand 0, single buffered']
    %11 = vsyncpa [#allocation3], 0
    %12 = vsyncpa [#allocation6], 0
    %13 = vsyncpa [#allocation4], 0
    // Predicated region
    $region2: #{tpu_custom_call.1} parent=1 // pred_check
      _
    $region3: #{tpu_custom_call.1} parent=1 // pred_check_branch
      %15 = sbr.rel (0) target = $region5
    $region4: #{tpu_custom_call.1} parent=1 // pred_region
      _
    $region5: #{tpu_custom_call.1} parent=1 // pred_fallthru
      _
    // Predicated region
    $region6: #{tpu_custom_call.1} parent=1 // pred_check
      _
    $region7: #{tpu_custom_call.1} parent=1 // pred_check_branch
      %17 = sbr.rel (0) target = $region9
    $region8: #{tpu_custom_call.1} parent=1 // pred_region
      _
    $region9: #{tpu_custom_call.1} parent=1 // pred_fallthru
      _
    // Predicated region
    $region10: #{tpu_custom_call.1} parent=1 // pred_check
      _
    $region11: #{tpu_custom_call.1} parent=1 // pred_check_branch
      %19 = sbr.rel (0) target = $region13
    $region12: #{tpu_custom_call.1} parent=1 // pred_region
      _
    $region13: #{tpu_custom_call.1} parent=1 // pred_fallthru
      _
    // Predicated region
    $region14: #{tpu_custom_call.1} parent=1 // pred_check
      _
    $region15: #{tpu_custom_call.1} parent=1 // pred_check_branch
      %21 = sbr.rel (0) target = $region17
    $region16: #{tpu_custom_call.1} parent=1 // pred_region
      %23 = vsyncadd [#allocation3], 0
      %s24 = sshll.u32 %s3, 4
      %s25 = int_to_ptr.hbm [resolvable:$true] %s24
      %s26 = sshll.u32 [#allocation2], 4
      %s27 = int_to_ptr.vmem [resolvable:$true] %s26
      %32 = dma.hbm_to_vmem [thread:$0]  %s25, 256, %s27, [#allocation3], 128, 128, 8
    $region17: #{tpu_custom_call.1} parent=1 // pred_fallthru
      _
    // Predicated region
    $region18: #{tpu_custom_call.1} parent=1 // pred_check
      _
    $region19: #{tpu_custom_call.1} parent=1 // pred_check_branch
      %34 = sbr.rel (0) target = $region21
    $region20: #{tpu_custom_call.1} parent=1 // pred_region
      %36 = vsyncadd [#allocation6], 0
      %s37 = sshll.u32 %s4, 4
      %s38 = int_to_ptr.hbm [resolvable:$true] %s37
      %s39 = sshll.u32 [#allocation5], 4
      %s40 = int_to_ptr.vmem [resolvable:$true] %s39
      %45 = dma.hbm_to_vmem [thread:$0]  %s38, 384, %s40, [#allocation6], 128, 128, 8
    $region21: #{tpu_custom_call.1} parent=1 // pred_fallthru
      _
    // Predicated region
    $region22: #{tpu_custom_call.1} parent=1 // pred_check
      _
    $region23: #{tpu_custom_call.1} parent=1 // pred_check_branch
      %47 = sbr.rel (0) target = $region25
    $region24: #{tpu_custom_call.1} parent=1 // pred_region
      %49 = vsyncadd [#allocation6], 0
      %s50 = sshll.u32 %s5, 4
      %s51 = int_to_ptr.hbm [resolvable:$true] %s50
      %s52 = sshll.u32 [#allocation7], 4
      %s53 = int_to_ptr.vmem [resolvable:$true] %s52
      %58 = dma.hbm_to_vmem [thread:$0]  %s51, 384, %s53, [#allocation6], 128, 128, 8
    $region25: #{tpu_custom_call.1} parent=1 // pred_fallthru
      _
    // Predicated region
    $region26: #{tpu_custom_call.1} parent=1 // pred_check
      _
    $region27: #{tpu_custom_call.1} parent=1 // pred_check_branch
      %60 = sbr.rel (0) target = $region29
    $region28: #{tpu_custom_call.1} parent=1 // pred_region
      %62 = dma.done [#allocation3], 256
    $region29: #{tpu_custom_call.1} parent=1 // pred_fallthru
      _
    // Predicated region
    $region30: #{tpu_custom_call.1} parent=1 // pred_check
      _
    $region31: #{tpu_custom_call.1} parent=1 // pred_check_branch
      %64 = sbr.rel (0) target = $region33
    $region32: #{tpu_custom_call.1} parent=1 // pred_region
      %66 = dma.done [#allocation6], 384
    $region33: #{tpu_custom_call.1} parent=1 // pred_fallthru
      _
    // Predicated region
    $region34: #{tpu_custom_call.1} parent=1 // pred_check
      _
    $region35: #{tpu_custom_call.1} parent=1 // pred_check_branch
      %68 = sbr.rel (0) target = $region37
    $region36: #{tpu_custom_call.1} parent=1 // pred_region
      %70 = dma.done [#allocation6], 384
    $region37: #{tpu_custom_call.1} parent=1 // pred_fallthru
      _
    %v71 = vld [vmem:[%s0] sm:$0xff]
    %v72 = vld [vmem:[%s1] sm:$0xff]
    %v73 = vlaneseq
    %v74 = vand.u32 %v73, 127
    %75 = vset.pattern.permute.xlu0 0
    %76 = vperm.xlu0 %75, %v71
    %v77 = vpop.permute.xlu0 %76
    %vm78 = vcmp.eq.s32.totalorder %v74, %v77
    %v79 = vsel %vm78, 1, 0
    %v80 = vcvt.s32.f32 %v79
    %81 = vset.pattern.permute.xlu0 0
    %82 = vperm.xlu0 %81, %v72
    %v83 = vpop.permute.xlu0 %82
    %vm84 = vcmp.eq.s32.totalorder %v74, %v83
    %v85 = vsel %vm84, 1, 0
    %v86 = vcvt.s32.f32 %v85
    %v87 = vld [vmem:[%s2] sm:$0xff]
    %v88 = vld [vmem:[%s2 + $0x8] sm:$0xff]
    %vm89 = vcmask 130048
    %v91 = vsel %vm89, %v80, 0
    %93 = vmatpush.msra.mxu0 0.0
    %94 = vmatpush.msra.mxu0 0.0
    %95 = vmatpush.msra.mxu0 0.0
    %96 = vmatpush.msra.mxu0 0.0
    %97 = vmatpush.msra.mxu0 0.0
    %98 = vmatpush.msra.mxu0 0.0
    %99 = vmatpush.msra.mxu0 0.0
    %100 = vmatpush.msra.mxu0 0.0
    %101 = vmatpush.msra.mxu0 0.0
    %102 = vmatpush.msra.mxu0 0.0
    %103 = vmatpush.msra.mxu0 0.0
    %104 = vmatpush.msra.mxu0 0.0
    %105 = vmatpush.msra.mxu0 0.0
    %106 = vmatpush.msra.mxu0 0.0
    %107 = vmatpush.msra.mxu0 %v88
    %108 = vmatpush.msra.mxu0 %v87
    %109 = vmatmul.f32.gmra.mxu0 %v91
    %v110 = vpop.f32.mrf.mxu0
    %v111 = vadd.f32 0.0, %v110
    %112 = vdwg.mxu0
    %v113 = vld [vmem:[#allocation2] sm:$0xff]
    %v114 = vld [vmem:[#allocation2 + $0x8] sm:$0xff]
    %115 = vmatpush.msra.mxu0 0.0
    %116 = vmatpush.msra.mxu0 0.0
    %117 = vmatpush.msra.mxu0 0.0
    %118 = vmatpush.msra.mxu0 0.0
    %119 = vmatpush.msra.mxu0 0.0
    %120 = vmatpush.msra.mxu0 0.0
    %121 = vmatpush.msra.mxu0 0.0
    %122 = vmatpush.msra.mxu0 0.0
    %123 = vmatpush.msra.mxu0 0.0
    %124 = vmatpush.msra.mxu0 0.0
    %125 = vmatpush.msra.mxu0 0.0
    %126 = vmatpush.msra.mxu0 0.0
    %127 = vmatpush.msra.mxu0 0.0
    %128 = vmatpush.msra.mxu0 0.0
    %129 = vmatpush.msra.mxu0 %v114
    %130 = vmatpush.msra.mxu0 %v113
    %131 = vmatmul.f32.gmra.mxu0 %v91
    %v132 = vpop.f32.mrf.mxu0
    %v133 = vadd.f32 0.0, %v132
    %134 = vdwg.mxu0
    %v135 = vld [vmem:[#allocation5] sm:$0xff]
    %v136 = vld [vmem:[#allocation5 + $0x8] sm:$0xff]
    %v137 = vld [vmem:[#allocation5 + $0x10] sm:$0xff]
    %vm138 = vcmask 195584
    %v140 = vsel %vm138, %v86, 0
    %142 = vmatpush.msra.mxu0 0.0
    %143 = vmatpush.msra.mxu0 0.0
    %144 = vmatpush.msra.mxu0 0.0
    %145 = vmatpush.msra.mxu0 0.0
    %146 = vmatpush.msra.mxu0 0.0
    %147 = vmatpush.msra.mxu0 0.0
    %148 = vmatpush.msra.mxu0 0.0
    %149 = vmatpush.msra.mxu0 0.0
    %150 = vmatpush.msra.mxu0 0.0
    %151 = vmatpush.msra.mxu0 0.0
    %152 = vmatpush.msra.mxu0 0.0
    %153 = vmatpush.msra.mxu0 0.0
    %154 = vmatpush.msra.mxu0 0.0
    %155 = vmatpush.msra.mxu0 %v137
    %156 = vmatpush.msra.mxu0 %v136
    %157 = vmatpush.msra.mxu0 %v135
    %158 = vmatmul.f32.gmra.mxu0 %v140
    %v159 = vpop.f32.mrf.mxu0
    %v160 = vadd.f32 0.0, %v159
    %161 = vdwg.mxu0
    %v162 = vld [vmem:[#allocation7] sm:$0xff]
    %v163 = vld [vmem:[#allocation7 + $0x8] sm:$0xff]
    %v164 = vld [vmem:[#allocation7 + $0x10] sm:$0xff]
    %165 = vmatpush.msra.mxu0 0.0
    %166 = vmatpush.msra.mxu0 0.0
    %167 = vmatpush.msra.mxu0 0.0
    %168 = vmatpush.msra.mxu0 0.0
    %169 = vmatpush.msra.mxu0 0.0
    %170 = vmatpush.msra.mxu0 0.0
    %171 = vmatpush.msra.mxu0 0.0
    %172 = vmatpush.msra.mxu0 0.0
    %173 = vmatpush.msra.mxu0 0.0
    %174 = vmatpush.msra.mxu0 0.0
    %175 = vmatpush.msra.mxu0 0.0
    %176 = vmatpush.msra.mxu0 0.0
    %177 = vmatpush.msra.mxu0 0.0
    %178 = vmatpush.msra.mxu0 %v164
    %179 = vmatpush.msra.mxu0 %v163
    %180 = vmatpush.msra.mxu0 %v162
    %181 = vmatmul.f32.gmra.mxu0 %v140
    %v182 = vpop.f32.mrf.mxu0
    %v183 = vadd.f32 0.0, %v182
    %184 = vdwg.mxu0
    %v185 = vadd.f32 %v111, %v133
    %v186 = vmul.f32 %v111, %v133
    %v187 = vadd.f32 %v185, %v186
    %v188 = vadd.f32 %v160, %v183
    %v189 = vmul.f32 %v160, %v183
    %v190 = vadd.f32 %v188, %v189
    %192 = vrot.lane.b32.xlu0 %v190, 32
    %v193 = vpop.permute.xlu0 %192
    %vm195 = vcmask 261120
    %v196 = vsel %vm195, %v187, %v193
    %v197 = vmul.f32 %v196, 0.33333334
    %vm198 = vcmask 523264
    %199 = vst.msk [vmem:[#allocation8] sm:$0xff] %vm198, %v197
    // Predicated region
    $region38: #{tpu_custom_call.1} parent=1 // pred_check
      _
    $region39: #{tpu_custom_call.1} parent=1 // pred_check_branch
      %201 = sbr.rel (0) target = $region41
    $region40: #{tpu_custom_call.1} parent=1 // pred_region
      %203 = vsyncadd [#allocation4], 0
      %s205 = sshll.u32 [#allocation8], 4
      %s206 = int_to_ptr.vmem [resolvable:$true] %s205
      %s207 = sshll.u32 %s6, 4
      %s208 = int_to_ptr.hbm [resolvable:$true] %s207
      %210 = dma.vmem_to_hbm [thread:$0]  %s206, 128, %s208, [#allocation4]
    $region41: #{tpu_custom_call.1} parent=1 // pred_fallthru
      _
    // Predicated region
    $region42: #{tpu_custom_call.1} parent=1 // pred_check
      _
    $region43: #{tpu_custom_call.1} parent=1 // pred_check_branch
      %212 = sbr.rel (0) target = $region45
    $region44: #{tpu_custom_call.1} parent=1 // pred_region
      %214 = dma.done [#allocation4], 128
    $region45: #{tpu_custom_call.1} parent=1 // pred_fallthru
      _
    %215 = vsyncpa [#allocation3], 1
    %216 = vsyncpa [#allocation6], 1
    %217 = vsyncpa [#allocation4], 1

</llo_original>
